<compile_context>
chip_gen: v7x
topology: tpu7x:2x2x1
jax: 0.10.0
libtpu: 0.0.40
codegen_flags: <defaults>
</compile_context>

<pallas_src>
import jax
import jax.numpy as jnp
from jax import lax
from jax.experimental import pallas as pl
from jax.experimental.pallas import tpu as pltpu


# --------------------------- VMEM budgeting -------------------------------- #

def _vmem_capacity_bytes():
    """Physical VMEM of the attached TPU generation; conservative fallback."""
    try:
        info = pltpu.get_tpu_info()
        cap = int(getattr(info, "vmem_capacity_bytes", 0))
        if cap > 0:
            return cap
    except Exception:
        pass
    return 64 << 20          # v7x-sized fallback (smallest current generation)


def _vmem_limit(need_bytes, cap):
    """Scoped-VMEM limit: cover our estimated need, never exceed physical."""
    return int(min(cap - (4 << 20), max(int(need_bytes), 32 << 20)))


def _round_up(x, m):
    return -(-x // m) * m


def _pick_hw_tile(HW, C, budget_bytes, itemsize=4):
    """Lane-tile width for the streamed (tiled) path -> (hw_t, hw_pad).

    Budget assumes ~8 live (C, hw_t) f32 blocks: double-buffered x & out,
    the fused-projection temp, and elementwise slack."""
    cap = max(128, ((budget_bytes // (8 * C * itemsize)) // 128) * 128)
    if HW <= cap:
        return HW, HW                          # one full-extent block
    # Prefer an exact multiple-of-128 divisor (no wrapper-side pad copy).
    best = 0
    t = 128
    while t <= cap:
        if HW % t == 0:
            best = t
        t += 128
    if best >= 512:
        return best, HW
    # No decent divisor: pad HW up to a multiple of a full-width tile; the
    # tail is masked inside the reduce kernel and sliced off after the apply.
    hw_t = cap
    return hw_t, _round_up(HW, hw_t)


# ----------------------------- kernels ------------------------------------ #

def _make_fused_kernel(c_pad, matmul_dtype):
    """Single-pass kernel: whole per-batch (C, HW) slab resident in VMEM."""

    def fused_kernel(x_ref, wkv_ref, wmp_ref, bvp_ref, bm_ref, wa_ref, ba_ref,
                     out_ref):
        x = x_ref[0]                                               # (C, HW) f32
        xm = x.astype(matmul_dtype)
        # Fused projection: rows [0:c] -> v, row [c_pad] -> k logits.
        p = jnp.dot(wkv_ref[...].astype(matmul_dtype), xm,
                    preferred_element_type=jnp.float32)            # (c_pad+8, HW)
        v = p[:c_pad]                                              # (c_pad, HW)
        k_logit = p[c_pad:c_pad + 1]                               # (1, HW)
        # Softmax over HW (bk dropped: constant shift is softmax-invariant).
        m = jnp.max(k_logit, axis=1, keepdims=True)
        e = jnp.exp(k_logit - m)                                   # (1, HW)
        s = jnp.sum(e, axis=1, keepdims=True)                      # (1, 1)
        # y = v @ softmax(k): MXU contraction over HW, normalize once.
        y = lax.dot_general(v, e, (((1,), (1,)), ((), ())),
                            preferred_element_type=jnp.float32) / s
        y = y + bvp_ref[...]                       # bv once (softmax sums to 1)
        z = jnp.dot(wmp_ref[...], y,
                    preferred_element_type=jnp.float32) + bm_ref[...]  # (C, 1)
        a_logit = jnp.dot(wa_ref[...].astype(matmul_dtype), xm,
                          preferred_element_type=jnp.float32)      # (1, HW)
        a = jax.nn.sigmoid(a_logit + ba_ref[...])
        out_ref[0] = (x + z * a).astype(out_ref.dtype)

    return fused_kernel


def _make_reduce_kernel(c_pad, HW, hw_t, need_mask, matmul_dtype):
    """Pass 1 of the tiled path: exact online softmax over HW tiles."""

    def reduce_kernel(x_ref, wkv_ref, wmp_ref, bvp_ref, bm_ref, z_ref,
                      m_sc, l_sc, acc_sc):
        t = pl.program_id(1)

        @pl.when(t == 0)
        def _init():
            m_sc[...] = jnp.full_like(m_sc, -jnp.inf)
            l_sc[...] = jnp.zeros_like(l_sc)
            acc_sc[...] = jnp.zeros_like(acc_sc)

        xm = x_ref[0].astype(matmul_dtype)                          # (C, hw_t)
        p = jnp.dot(wkv_ref[...].astype(matmul_dtype), xm,
                    preferred_element_type=jnp.float32)             # (c_pad+8, hw_t)
        v = p[:c_pad]                                               # (c_pad, hw_t)
        k_logit = p[c_pad:c_pad + 1]                                # (1, hw_t)

        if need_mask:   # padded tail columns must not contribute to softmax
            col = t * hw_t + lax.broadcasted_iota(jnp.int32, k_logit.shape, 1)
            k_logit = jnp.where(col < HW, k_logit, jnp.float32(-1e30))

        m_prev = m_sc[...]                                          # (1, 1)
        m_new = jnp.maximum(m_prev, jnp.max(k_logit, axis=1, keepdims=True))
        alpha = jnp.exp(m_prev - m_new)
        pexp = jnp.exp(k_logit - m_new)                             # (1, hw_t)
        l_sc[...] = alpha * l_sc[...] + jnp.sum(pexp, axis=1, keepdims=True)
        acc_sc[...] = alpha * acc_sc[...] + lax.dot_general(
            v, pexp, (((1,), (1,)), ((), ())),
            preferred_element_type=jnp.float32)                     # (c_pad, 1)
        m_sc[...] = m_new

        @pl.when(t == pl.num_programs(1) - 1)
        def _finalize():
            y = acc_sc[...] / l_sc[...] + bvp_ref[...]              # (c_pad, 1)
            z = jnp.dot(wmp_ref[...], y, preferred_element_type=jnp.float32)
            z_ref[0] = (z + bm_ref[...]).astype(z_ref.dtype)        # (C, 1)

    return reduce_kernel


def _make_apply_kernel(matmul_dtype):
    """Pass 2 of the tiled path: out = x + z * sigmoid(wa @ x + ba)."""

    def apply_kernel(x_ref, z_ref, wa_ref, ba_ref, out_ref):
        x = x_ref[0]                                                # (C, hw_t)
        a_logit = jnp.dot(wa_ref[...].astype(matmul_dtype),
                          x.astype(matmul_dtype),
                          preferred_element_type=jnp.float32)       # (1, hw_t)
        a = jax.nn.sigmoid(a_logit + ba_ref[...])
        out_ref[0] = (x + z_ref[0] * a).astype(out_ref.dtype)

    return apply_kernel


# ----------------------------- wrapper ------------------------------------ #

def context_aggregation(x_nchw, params, *, hw_tile=None, force_tiled=False,
                        matmul_dtype=jnp.float32):
    """x_nchw: (N, C, H, W) float32. Returns (N, C, H, W) float32."""
    N, C, H, W = x_nchw.shape
    HW = H * W
    c = params["wv"].shape[1]
    c_pad = _round_up(c, 8)
    R = c_pad + 8
    itemsize = 4

    # Weight plumbing (tiny, plain JAX): channel-major, sublane-aligned, fused.
    wkv = jnp.zeros((R, C), jnp.float32)
    wkv = wkv.at[:c].set(params["wv"].T)                 # v rows [0:c]
    wkv = wkv.at[c_pad].set(params["wk"].reshape(C))     # k row on 8-row boundary
    wmp = jnp.zeros((C, c_pad), jnp.float32).at[:, :c].set(params["wm"].T)
    bvp = jnp.zeros((c_pad, 1), jnp.float32).at[:c, 0].set(params["bv"].reshape(c))
    bm = params["bm"].reshape(C, 1)
    wa_t = params["wa"].reshape(1, C)
    ba = params["ba"].reshape(1, 1)
    # NOTE: bk is dropped entirely (constant shift under softmax).

    x = x_nchw.reshape(N, C, HW)          # free reshape: no transpose traffic

    cap = _vmem_capacity_bytes()
    usable = max(cap // 2, cap - (16 << 20))
    weight_bytes = 2 * (R * C + C * c_pad + c_pad + 2 * C + 1) * itemsize
    batch_bytes = C * HW * itemsize
    # Live VMEM in the fused kernel: double-buffered x + out, the projection
    # temp (R/C of a block), and one block of elementwise slack.
    fused_live = (5.0 + R / C) * batch_bytes + weight_bytes + (2 << 20)
    use_fused = (hw_tile is None) and (not force_tiled) and (fused_live <= usable)

    if use_fused:
        out = pl.pallas_call(
            _make_fused_kernel(c_pad, matmul_dtype),
            out_shape=jax.ShapeDtypeStruct((N, C, HW), jnp.float32),
            grid=(N,),
            in_specs=[
                pl.BlockSpec((1, C, HW), lambda n: (n, 0, 0)),     # x
                pl.BlockSpec((R, C), lambda n: (0, 0)),            # [wv;0;wk;0]
                pl.BlockSpec((C, c_pad), lambda n: (0, 0)),        # wm^T (padded)
                pl.BlockSpec((c_pad, 1), lambda n: (0, 0)),        # bv (padded)
                pl.BlockSpec((C, 1), lambda n: (0, 0)),            # bm
                pl.BlockSpec((1, C), lambda n: (0, 0)),            # wa^T
                pl.BlockSpec((1, 1), lambda n: (0, 0)),            # ba
            ],
            out_specs=pl.BlockSpec((1, C, HW), lambda n: (n, 0, 0)),
            compiler_params=pltpu.CompilerParams(
                dimension_semantics=("parallel",),
                vmem_limit_bytes=_vmem_limit(fused_live, cap)),
        )(x, wkv, wmp, bvp, bm, wa_t, ba)
        return out.reshape(N, C, H, W)

    # ---- tiled two-pass fallback (exact flash-style online softmax over HW).
    if hw_tile is not None:
        hw_t = int(hw_tile)
        assert hw_t == HW or hw_t % 128 == 0, "hw_tile must be a multiple of 128"
        hw_pad = _round_up(HW, hw_t)
    else:
        hw_t, hw_pad = _pick_hw_tile(HW, C, usable, itemsize)
    n_hw = hw_pad // hw_t
    need_mask = hw_pad != HW
    if need_mask:
        # TODO(synk): the wrapper-side pad + final slice costs one extra pass
        # over x/out; only taken when HW has no usable multiple-of-128 divisor.
        x = jnp.pad(x, ((0, 0), (0, 0), (0, hw_pad - HW)))

    block_bytes = C * hw_t * itemsize
    vmem_limit = _vmem_limit(8 * block_bytes + weight_bytes + (2 << 20), cap)
    grid = (N, n_hw)

    # Pass 1: z = conv_m(v @ softmax(k)) per batch, shape (N, C, 1).
    z = pl.pallas_call(
        _make_reduce_kernel(c_pad, HW, hw_t, need_mask, matmul_dtype),
        out_shape=jax.ShapeDtypeStruct((N, C, 1), jnp.float32),
        grid=grid,
        in_specs=[
            pl.BlockSpec((1, C, hw_t), lambda n, t: (n, 0, t)),    # x
            pl.BlockSpec((R, C), lambda n, t: (0, 0)),             # [wv;0;wk;0]
            pl.BlockSpec((C, c_pad), lambda n, t: (0, 0)),         # wm^T
            pl.BlockSpec((c_pad, 1), lambda n, t: (0, 0)),         # bv
            pl.BlockSpec((C, 1), lambda n, t: (0, 0)),             # bm
        ],
        out_specs=pl.BlockSpec((1, C, 1), lambda n, t: (n, 0, 0)),
        scratch_shapes=[
            pltpu.VMEM((1, 1), jnp.float32),       # running max
            pltpu.VMEM((1, 1), jnp.float32),       # running sum-exp
            pltpu.VMEM((c_pad, 1), jnp.float32),   # running v-weighted acc
        ],
        compiler_params=pltpu.CompilerParams(
            dimension_semantics=("parallel", "arbitrary"),
            vmem_limit_bytes=vmem_limit),
    )(x, wkv, wmp, bvp, bm)
    # TODO(synk): on v7x (2 TCs) with small N, split the HW reduction into a
    # second 'parallel' grid axis with per-core partial (m,l,acc) + combine.

    # Pass 2: out = x + z * sigmoid(conv_a(x)); fully parallel streaming.
    out = pl.pallas_call(
        _make_apply_kernel(matmul_dtype),
        out_shape=jax.ShapeDtypeStruct((N, C, hw_pad), jnp.float32),
        grid=grid,
        in_specs=[
            pl.BlockSpec((1, C, hw_t), lambda n, t: (n, 0, t)),    # x
            pl.BlockSpec((1, C, 1), lambda n, t: (n, 0, 0)),       # z
            pl.BlockSpec((1, C), lambda n, t: (0, 0)),             # wa^T
            pl.BlockSpec((1, 1), lambda n, t: (0, 0)),             # ba
        ],
        out_specs=pl.BlockSpec((1, C, hw_t), lambda n, t: (n, 0, t)),
        compiler_params=pltpu.CompilerParams(
            dimension_semantics=("parallel", "parallel"),
            vmem_limit_bytes=vmem_limit),
    )(x, z, wa_t, ba)

    if need_mask:
        out = out[:, :, :HW]
    return out.reshape(N, C, H, W)


# ----------------------------- reference ----------------------------------- #

def reference(x_nchw, params):
    """Pure-JAX reference mirroring the PyTorch forward."""
    N, C, H, W = x_nchw.shape
    HW = H * W
    x = jnp.transpose(x_nchw, (0, 2, 3, 1)).reshape(N, HW, C)

    a = jax.nn.sigmoid(x @ params["wa"] + params["ba"])            # (N, HW, 1)
    k = jax.nn.softmax(x @ params["wk"] + params["bk"], axis=1)    # (N, HW, 1)
    v = x @ params["wv"] + params["bv"]                            # (N, HW, c)
    y = jnp.sum(v * k, axis=1, keepdims=True)                      # (N, 1, c)
    z = y @ params["wm"] + params["bm"]                            # (N, 1, C)
    out = x + z * a
    return jnp.transpose(out.reshape(N, H, W, C), (0, 3, 1, 2))


def init_params(key, C, reduction=1):
    """Deterministic synthetic init (module shapes; nonzero so compute is exercised)."""
    c = max(C // reduction, 1)
    ks = jax.random.split(key, 8)
    s = 0.1
    return dict(
        wa=s * jax.random.normal(ks[0], (C, 1), jnp.float32),
        ba=s * jax.random.normal(ks[1], (1, 1), jnp.float32),
        wk=s * jax.random.normal(ks[2], (C, 1), jnp.float32),
        bk=s * jax.random.normal(ks[3], (1, 1), jnp.float32),
        wv=s * jax.random.normal(ks[4], (C, c), jnp.float32),
        bv=s * jax.random.normal(ks[5], (1, c), jnp.float32),
        # NOTE: real init_weights() zeros conv m; nonzero here so the kernel
        # path is nontrivial. forward() semantics unchanged.
        wm=s * jax.random.normal(ks[6], (c, C), jnp.float32),
        bm=s * jax.random.normal(ks[7], (1, C), jnp.float32),
    )


if __name__ == "__main__":
    key = jax.random.PRNGKey(0)
    kx, kx2, kp = jax.random.split(key, 3)

    N, C, H, W = 2, 4, 16, 16
    x = jax.random.normal(kx, (N, C, H, W), jnp.float32)
    params = init_params(kp, C, reduction=1)
    ref = reference(x, params)

    # 1) Fused single-pass path (per-batch slab resident in VMEM).
    out = jax.block_until_ready(context_aggregation(x, params))
    assert out.shape == (N, C, H, W)
    assert jnp.allclose(out, ref, atol=1e-4, rtol=1e-4), "fused mismatch"

    # 2) Tiled two-pass online-softmax path (2 HW tiles of 128).
    out_t = jax.block_until_ready(
        context_aggregation(x, params, hw_tile=128, force_tiled=True))
    assert jnp.allclose(out_t, ref, atol=1e-4, rtol=1e-4), "tiled mismatch"

    # 3) Padded + masked tail path (HW=144 -> padded to 256, last tile masked).
    x2 = jax.random.normal(kx2, (1, C, 12, 12), jnp.float32)
    ref2 = reference(x2, params)
    out_m = jax.block_until_ready(
        context_aggregation(x2, params, hw_tile=128, force_tiled=True))
    assert jnp.allclose(out_m, ref2, atol=1e-4, rtol=1e-4), "masked mismatch"

    # 4) bf16 MXU operands (optional fast path for large c): looser tolerance.
    out_bf = jax.block_until_ready(
        context_aggregation(x, params, matmul_dtype=jnp.bfloat16))
    assert jnp.allclose(out_bf, ref, atol=2e-2, rtol=2e-2), "bf16 mismatch"

    print("KERNEL_OK")
</pallas_src>

<mosaic_0001>
module attributes {stable_mosaic.version = 11 : i64} {
  func.func @fused_kernel(%arg0: i32, %arg1: memref<1x4x256xf32, #tpu.memory_space<vmem>>, %arg2: memref<16x4xf32, #tpu.memory_space<vmem>>, %arg3: memref<4x8xf32, #tpu.memory_space<vmem>>, %arg4: memref<8x1xf32, #tpu.memory_space<vmem>>, %arg5: memref<4x1xf32, #tpu.memory_space<vmem>>, %arg6: memref<1x4xf32, #tpu.memory_space<vmem>>, %arg7: memref<1x1xf32, #tpu.memory_space<vmem>>, %arg8: memref<1x4x256xf32, #tpu.memory_space<vmem>>) attributes {dimension_semantics = [#tpu.dimension_semantics<parallel>], iteration_bounds = array<i64: 2>, scalar_prefetch = 0 : i64, scratch_operands = 0 : i64, tpu.core_type = #tpu.core_type<tc>, window_params = [{transform_indices = @transform_0, window_bounds = array<i64: 1, 4, 256>}, {pipeline_mode = #tpu.pipeline_mode<synchronous>, transform_indices = @transform_1, window_bounds = array<i64: 16, 4>}, {pipeline_mode = #tpu.pipeline_mode<synchronous>, transform_indices = @transform_2, window_bounds = array<i64: 4, 8>}, {pipeline_mode = #tpu.pipeline_mode<synchronous>, transform_indices = @transform_3, window_bounds = array<i64: 8, 1>}, {pipeline_mode = #tpu.pipeline_mode<synchronous>, transform_indices = @transform_4, window_bounds = array<i64: 4, 1>}, {pipeline_mode = #tpu.pipeline_mode<synchronous>, transform_indices = @transform_5, window_bounds = array<i64: 1, 4>}, {pipeline_mode = #tpu.pipeline_mode<synchronous>, transform_indices = @transform_6, window_bounds = array<i64: 1, 1>}, {transform_indices = @transform_7, window_bounds = array<i64: 1, 4, 256>}]} {
    %c0 = arith.constant 0 : index
    %c0_0 = arith.constant 0 : index
    %c0_1 = arith.constant 0 : index
    %0 = vector.load %arg1[%c0, %c0_0, %c0_1] : memref<1x4x256xf32, #tpu.memory_space<vmem>>, vector<1x4x256xf32>
    %1 = vector.shape_cast %0 : vector<1x4x256xf32> to vector<4x256xf32>
    %c0_2 = arith.constant 0 : index
    %c0_3 = arith.constant 0 : index
    %2 = vector.load %arg2[%c0_2, %c0_3] : memref<16x4xf32, #tpu.memory_space<vmem>>, vector<16x4xf32>
    %cst = arith.constant dense<0.000000e+00> : vector<16x256xf32>
    %3 = tpu.matmul %2, %1, %cst {dimension_numbers = #tpu.dot_dimension_numbers<[1], [0], [0], [1], [0, 0, 1, 1], [], []>} : vector<16x4xf32>, vector<4x256xf32>, vector<16x256xf32> -> vector<16x256xf32>
    %4 = vector.extract_strided_slice %3 {offsets = [0, 0], sizes = [8, 256], strides = [1, 1]} : vector<16x256xf32> to vector<8x256xf32>
    %5 = vector.extract_strided_slice %3 {offsets = [8, 0], sizes = [1, 256], strides = [1, 1]} : vector<16x256xf32> to vector<1x256xf32>
    %cst_4 = arith.constant dense<0xFF800000> : vector<1xf32>
    %6 = vector.multi_reduction <maximumf>, %5, %cst_4 [1] : vector<1x256xf32> to vector<1xf32>
    %7 = vector.shape_cast %6 : vector<1xf32> to vector<1x1xf32>
    %8 = vector.broadcast %7 : vector<1x1xf32> to vector<1x256xf32>
    %9 = arith.subf %5, %8 : vector<1x256xf32>
    %10 = math.exp %9 : vector<1x256xf32>
    %cst_5 = arith.constant dense<0.000000e+00> : vector<1xf32>
    %11 = vector.multi_reduction <add>, %10, %cst_5 [1] : vector<1x256xf32> to vector<1xf32>
    %12 = vector.shape_cast %11 : vector<1xf32> to vector<1x1xf32>
    %cst_6 = arith.constant dense<0.000000e+00> : vector<8x1xf32>
    %13 = tpu.matmul %4, %10, %cst_6 {dimension_numbers = #tpu.dot_dimension_numbers<[1], [1], [0], [0], [0, 0, 1, 0], [], []>} : vector<8x256xf32>, vector<1x256xf32>, vector<8x1xf32> -> vector<8x1xf32>
    %14 = vector.broadcast %12 : vector<1x1xf32> to vector<8x1xf32>
    %15 = arith.divf %13, %14 : vector<8x1xf32>
    %c0_7 = arith.constant 0 : index
    %c0_8 = arith.constant 0 : index
    %16 = vector.load %arg4[%c0_7, %c0_8] : memref<8x1xf32, #tpu.memory_space<vmem>>, vector<8x1xf32>
    %17 = arith.addf %15, %16 : vector<8x1xf32>
    %c0_9 = arith.constant 0 : index
    %c0_10 = arith.constant 0 : index
    %18 = vector.load %arg3[%c0_9, %c0_10] : memref<4x8xf32, #tpu.memory_space<vmem>>, vector<4x8xf32>
    %cst_11 = arith.constant dense<0.000000e+00> : vector<4x1xf32>
    %19 = tpu.matmul %18, %17, %cst_11 {dimension_numbers = #tpu.dot_dimension_numbers<[1], [0], [0], [1], [0, 0, 1, 1], [], []>} : vector<4x8xf32>, vector<8x1xf32>, vector<4x1xf32> -> vector<4x1xf32>
    %c0_12 = arith.constant 0 : index
    %c0_13 = arith.constant 0 : index
    %20 = vector.load %arg5[%c0_12, %c0_13] : memref<4x1xf32, #tpu.memory_space<vmem>>, vector<4x1xf32>
    %21 = arith.addf %19, %20 : vector<4x1xf32>
    %c0_14 = arith.constant 0 : index
    %c0_15 = arith.constant 0 : index
    %22 = vector.load %arg6[%c0_14, %c0_15] : memref<1x4xf32, #tpu.memory_space<vmem>>, vector<1x4xf32>
    %cst_16 = arith.constant dense<0.000000e+00> : vector<1x256xf32>
    %23 = tpu.matmul %22, %1, %cst_16 {dimension_numbers = #tpu.dot_dimension_numbers<[1], [0], [0], [1], [0, 0, 1, 1], [], []>} : vector<1x4xf32>, vector<4x256xf32>, vector<1x256xf32> -> vector<1x256xf32>
    %c0_17 = arith.constant 0 : index
    %c0_18 = arith.constant 0 : index
    %24 = vector.load %arg7[%c0_17, %c0_18] : memref<1x1xf32, #tpu.memory_space<vmem>>, vector<1x1xf32>
    %25 = vector.broadcast %24 : vector<1x1xf32> to vector<1x256xf32>
    %26 = arith.addf %23, %25 : vector<1x256xf32>
    %27 = arith.negf %26 : vector<1x256xf32>
    %28 = math.exp %27 : vector<1x256xf32>
    %cst_19 = arith.constant 1.000000e+00 : f32
    %29 = vector.broadcast %cst_19 : f32 to vector<1x256xf32>
    %30 = arith.addf %29, %28 : vector<1x256xf32>
    %31 = arith.divf %29, %30 : vector<1x256xf32>
    %32 = vector.broadcast %21 : vector<4x1xf32> to vector<4x256xf32>
    %33 = vector.broadcast %31 : vector<1x256xf32> to vector<4x256xf32>
    %34 = arith.mulf %32, %33 : vector<4x256xf32>
    %35 = arith.addf %1, %34 : vector<4x256xf32>
    %c0_20 = arith.constant 0 : index
    %c0_21 = arith.constant 0 : index
    %c0_22 = arith.constant 0 : index
    %36 = vector.load %arg8[%c0_20, %c0_21, %c0_22] : memref<1x4x256xf32, #tpu.memory_space<vmem>>, vector<1x4x256xf32>
    %37 = vector.shape_cast %36 : vector<1x4x256xf32> to vector<4x256xf32>
    %38 = vector.shape_cast %35 : vector<4x256xf32> to vector<1x4x256xf32>
    tpu.vector_store %arg8[%c0_20, %c0_21, %c0_22], %38 {strides = array<i32>} : memref<1x4x256xf32, #tpu.memory_space<vmem>>, vector<1x4x256xf32>,
    return
  }
  func.func @transform_0(%arg0: i32) -> (i32, i32, i32) {
    %c0_i32 = arith.constant 0 : i32
    %c0_i32_0 = arith.constant 0 : i32
    %c0_i32_1 = arith.constant 0 : i32
    return %arg0, %c0_i32, %c0_i32_0 : i32, i32, i32
  }
  func.func @transform_1(%arg0: i32) -> (i32, i32) {
    %c0_i32 = arith.constant 0 : i32
    %c0_i32_0 = arith.constant 0 : i32
    %c0_i32_1 = arith.constant 0 : i32
    return %c0_i32, %c0_i32_0 : i32, i32
  }
  func.func @transform_2(%arg0: i32) -> (i32, i32) {
    %c0_i32 = arith.constant 0 : i32
    %c0_i32_0 = arith.constant 0 : i32
    %c0_i32_1 = arith.constant 0 : i32
    return %c0_i32, %c0_i32_0 : i32, i32
  }
  func.func @transform_3(%arg0: i32) -> (i32, i32) {
    %c0_i32 = arith.constant 0 : i32
    %c0_i32_0 = arith.constant 0 : i32
    %c0_i32_1 = arith.constant 0 : i32
    return %c0_i32, %c0_i32_0 : i32, i32
  }
  func.func @transform_4(%arg0: i32) -> (i32, i32) {
    %c0_i32 = arith.constant 0 : i32
    %c0_i32_0 = arith.constant 0 : i32
    %c0_i32_1 = arith.constant 0 : i32
    return %c0_i32, %c0_i32_0 : i32, i32
  }
  func.func @transform_5(%arg0: i32) -> (i32, i32) {
    %c0_i32 = arith.constant 0 : i32
    %c0_i32_0 = arith.constant 0 : i32
    %c0_i32_1 = arith.constant 0 : i32
    return %c0_i32, %c0_i32_0 : i32, i32
  }
  func.func @transform_6(%arg0: i32) -> (i32, i32) {
    %c0_i32 = arith.constant 0 : i32
    %c0_i32_0 = arith.constant 0 : i32
    %c0_i32_1 = arith.constant 0 : i32
    return %c0_i32, %c0_i32_0 : i32, i32
  }
  func.func @transform_7(%arg0: i32) -> (i32, i32, i32) {
    %c0_i32 = arith.constant 0 : i32
    %c0_i32_0 = arith.constant 0 : i32
    %c0_i32_1 = arith.constant 0 : i32
    return %arg0, %c0_i32, %c0_i32_0 : i32, i32, i32
  }
}

</mosaic_0001>

<llo_original>
// kernel: tpu_custom_call.1
$region0: #{tpu_custom_call.1}
  #allocation0 [shape = 'u32[]', space=smem, size = 0x4, offset = 0x4, fixed_abs, tag = 'smem constant byte address 0x4 - core index']
  #allocation1 [shape = 'u32[144,128]{1,0:T(1,128)}', space=vmem, size = 0x12000, scoped, tag = 'internal scratch']
  #allocation2 [shape = 'f32[1,1]{1,0:T(1,128)S(1)}', space=vmem, size = 0x200, scoped, tag = 'scoped memory for tpu_custom_call.1']
  %s0 = inlined_call_operand.vmem [shape: f32[2,4,256], index: 0, kind: input, shape index: {}]
  %s1 = inlined_call_operand.vmem [shape: f32[16,4], index: 1, kind: input, shape index: {}]
  %s2 = inlined_call_operand.vmem [shape: f32[4,8], index: 2, kind: input, shape index: {}]
  %s3 = inlined_call_operand.vmem [shape: f32[8,1], index: 3, kind: input, shape index: {}]
  %s4 = inlined_call_operand.vmem [shape: f32[4,1], index: 4, kind: input, shape index: {}]
  %s5 = inlined_call_operand.vmem [shape: f32[1,4], index: 5, kind: input, shape index: {}]
  %s6 = inlined_call_operand.<no memory space> [shape: f32[1,1], index: 6, kind: input, shape index: {}]
  %s7 = inlined_call_operand.hbm [shape: f32[2,4,256], index: 7, kind: output, shape index: {}]
  %s8 = sld [smem:[#allocation0]]
  $region61: #{tpu_custom_call.1} parent=0
    _
  %s10 = ssub.s32 1, %s8
  %s11 = scalar_select 0, %s10, %s8
  %v12 = vstv %s6
  %13 = vst [vmem:[#allocation2] sm:$0x1] %v12
  $region1: #{tpu_custom_call.1} parent=0
    #allocation3 [shape = 'u8[8192]{0}', space=vmem, size = 0x2000, scoped, tag = 'output window, operand 0']
    #allocation4 [shape = 's32[2]{0}', space=sflag, size = 0x8, scoped, tag = 'scoped memory for tpu_custom_call.1']
    %14 = vsyncpa [#allocation4], 0
    %s15 = scalar_lea.sflag [#allocation4], 1
    %16 = vsyncpa %s15, 0
    loop: start=0, step=1, limit=4
    $region2: #{tpu_custom_call.1} parent=1 // loop_pre_header
      _
    $region3: #{tpu_custom_call.1} parent=1 // loop_header
      %s18 = sphi 0, %s22
      %p19 = scmp.ge.s32.totalorder %s18, 4
      %s28 = sphi 0, %s30
      %s31 = sphi 0, %s28
      %s32 = sphi 0, %s31
      %s48 = sphi 0, %s32
      %s52 = sphi 0, %s52
      %s54 = sphi 0, %s52
      %s55 = sphi 0, %s54
      %s69 = sphi 0, %s55
      %s73 = sphi 0, %s73
      %s75 = sphi 0, %s73
      %s76 = sphi 0, %s75
      %s90 = sphi 0, %s76
      %s94 = sphi 0, %s94
      %s96 = sphi 0, %s94
      %s97 = sphi 0, %s96
      %s111 = sphi 0, %s97
      %s115 = sphi 0, %s115
      %s117 = sphi 0, %s115
      %s118 = sphi 0, %s117
      %s132 = sphi 0, %s118
      %s136 = sphi 0, %s136
      %s138 = sphi 0, %s136
      %s139 = sphi 0, %s138
      %s153 = sphi 0, %s139
      %s157 = sphi 0, %s157
      %s159 = sphi 0, %s157
      %s160 = sphi 0, %s159
      %s174 = sphi 0, %s160
      %s180 = sphi 0, %s182
      %s183 = sphi 0, %s180
      %s184 = sphi 0, %s183
      %s200 = sphi 0, %s184
    $region4: #{tpu_custom_call.1} parent=1 // loop_header_branch
      %21 = sbr.rel (%p19) target = $region8
    $region5: #{tpu_custom_call.1} parent=1 // loop_body
      %s23 = ssub.s32 %s18, 1
      %s24 = ssub.s32 %s18, 2
      %s25 = sadd.s32 %s18, 1
      %s26 = ssub.s32 %s18, %s25
      %p27 = scmp.eq.s32.totalorder %s26, 0
      %s29 = sadd.s32 %s28, 1
      %s30 = scalar_select %p27, %s28, %s29
      %p33 = pneg %p27
      %p34 = scmp.eq.s32.totalorder %s18, 1
      %p35 = por %p33, %p34
      %p36 = scmp.ne.s32.totalorder %s28, %s31
      %p37 = scmp.eq.s32.totalorder %s18, 0
      %p38 = por %p36, %p37
      %p39 = scmp.ne.s32.totalorder %s28, %s31
      %p40 = scmp.eq.s32.totalorder %s23, 1
      %p41 = por %p39, %p40
      %p42 = scmp.ne.s32.totalorder %s31, %s32
      %p43 = scmp.eq.s32.totalorder %s23, 0
      %p44 = por %p42, %p43
      %p45 = scmp.ne.s32.totalorder %s31, %s32
      %p46 = scmp.eq.s32.totalorder %s24, 1
      %p47 = por %p45, %p46
      %p49 = scmp.ne.s32.totalorder %s32, %s48
      %p50 = scmp.eq.s32.totalorder %s24, 0
      %p51 = por %p49, %p50
      %s53 = sadd.s32 %s52, 1
      %p56 = scmp.eq.s32.totalorder %s18, 1
      %p57 = scmp.ne.s32.totalorder %s52, %s54
      %p58 = scmp.eq.s32.totalorder %s18, 0
      %p59 = por %p57, %p58
      %p60 = scmp.ne.s32.totalorder %s52, %s54
      %p61 = scmp.eq.s32.totalorder %s23, 1
      %p62 = por %p60, %p61
      %p63 = scmp.ne.s32.totalorder %s54, %s55
      %p64 = scmp.eq.s32.totalorder %s23, 0
      %p65 = por %p63, %p64
      %p66 = scmp.ne.s32.totalorder %s54, %s55
      %p67 = scmp.eq.s32.totalorder %s24, 1
      %p68 = por %p66, %p67
      %p70 = scmp.ne.s32.totalorder %s55, %s69
      %p71 = scmp.eq.s32.totalorder %s24, 0
      %p72 = por %p70, %p71
      %s74 = sadd.s32 %s73, 1
      %p77 = scmp.eq.s32.totalorder %s18, 1
      %p78 = scmp.ne.s32.totalorder %s73, %s75
      %p79 = scmp.eq.s32.totalorder %s18, 0
      %p80 = por %p78, %p79
      %p81 = scmp.ne.s32.totalorder %s73, %s75
      %p82 = scmp.eq.s32.totalorder %s23, 1
      %p83 = por %p81, %p82
      %p84 = scmp.ne.s32.totalorder %s75, %s76
      %p85 = scmp.eq.s32.totalorder %s23, 0
      %p86 = por %p84, %p85
      %p87 = scmp.ne.s32.totalorder %s75, %s76
      %p88 = scmp.eq.s32.totalorder %s24, 1
      %p89 = por %p87, %p88
      %p91 = scmp.ne.s32.totalorder %s76, %s90
      %p92 = scmp.eq.s32.totalorder %s24, 0
      %p93 = por %p91, %p92
      %s95 = sadd.s32 %s94, 1
      %p98 = scmp.eq.s32.totalorder %s18, 1
      %p99 = scmp.ne.s32.totalorder %s94, %s96
      %p100 = scmp.eq.s32.totalorder %s18, 0
      %p101 = por %p99, %p100
      %p102 = scmp.ne.s32.totalorder %s94, %s96
      %p103 = scmp.eq.s32.totalorder %s23, 1
      %p104 = por %p102, %p103
      %p105 = scmp.ne.s32.totalorder %s96, %s97
      %p106 = scmp.eq.s32.totalorder %s23, 0
      %p107 = por %p105, %p106
      %p108 = scmp.ne.s32.totalorder %s96, %s97
      %p109 = scmp.eq.s32.totalorder %s24, 1
      %p110 = por %p108, %p109
      %p112 = scmp.ne.s32.totalorder %s97, %s111
      %p113 = scmp.eq.s32.totalorder %s24, 0
      %p114 = por %p112, %p113
      %s116 = sadd.s32 %s115, 1
      %p119 = scmp.eq.s32.totalorder %s18, 1
      %p120 = scmp.ne.s32.totalorder %s115, %s117
      %p121 = scmp.eq.s32.totalorder %s18, 0
      %p122 = por %p120, %p121
      %p123 = scmp.ne.s32.totalorder %s115, %s117
      %p124 = scmp.eq.s32.totalorder %s23, 1
      %p125 = por %p123, %p124
      %p126 = scmp.ne.s32.totalorder %s117, %s118
      %p127 = scmp.eq.s32.totalorder %s23, 0
      %p128 = por %p126, %p127
      %p129 = scmp.ne.s32.totalorder %s117, %s118
      %p130 = scmp.eq.s32.totalorder %s24, 1
      %p131 = por %p129, %p130
      %p133 = scmp.ne.s32.totalorder %s118, %s132
      %p134 = scmp.eq.s32.totalorder %s24, 0
      %p135 = por %p133, %p134
      %s137 = sadd.s32 %s136, 1
      %p140 = scmp.eq.s32.totalorder %s18, 1
      %p141 = scmp.ne.s32.totalorder %s136, %s138
      %p142 = scmp.eq.s32.totalorder %s18, 0
      %p143 = por %p141, %p142
      %p144 = scmp.ne.s32.totalorder %s136, %s138
      %p145 = scmp.eq.s32.totalorder %s23, 1
      %p146 = por %p144, %p145
      %p147 = scmp.ne.s32.totalorder %s138, %s139
      %p148 = scmp.eq.s32.totalorder %s23, 0
      %p149 = por %p147, %p148
      %p150 = scmp.ne.s32.totalorder %s138, %s139
      %p151 = scmp.eq.s32.totalorder %s24, 1
      %p152 = por %p150, %p151
      %p154 = scmp.ne.s32.totalorder %s139, %s153
      %p155 = scmp.eq.s32.totalorder %s24, 0
      %p156 = por %p154, %p155
      %s158 = sadd.s32 %s157, 1
      %p161 = scmp.eq.s32.totalorder %s18, 1
      %p162 = scmp.ne.s32.totalorder %s157, %s159
      %p163 = scmp.eq.s32.totalorder %s18, 0
      %p164 = por %p162, %p163
      %p165 = scmp.ne.s32.totalorder %s157, %s159
      %p166 = scmp.eq.s32.totalorder %s23, 1
      %p167 = por %p165, %p166
      %p168 = scmp.ne.s32.totalorder %s159, %s160
      %p169 = scmp.eq.s32.totalorder %s23, 0
      %p170 = por %p168, %p169
      %p171 = scmp.ne.s32.totalorder %s159, %s160
      %p172 = scmp.eq.s32.totalorder %s24, 1
      %p173 = por %p171, %p172
      %p175 = scmp.ne.s32.totalorder %s160, %s174
      %p176 = scmp.eq.s32.totalorder %s24, 0
      %p177 = por %p175, %p176
      %s178 = ssub.s32 %s18, %s25
      %p179 = scmp.eq.s32.totalorder %s178, 0
      %s181 = sadd.s32 %s180, 1
      %s182 = scalar_select %p179, %s180, %s181
      %p185 = pneg %p179
      %p186 = scmp.eq.s32.totalorder %s18, 1
      %p187 = por %p185, %p186
      %p188 = scmp.ne.s32.totalorder %s180, %s183
      %p189 = scmp.eq.s32.totalorder %s18, 0
      %p190 = por %p188, %p189
      %p191 = scmp.ne.s32.totalorder %s180, %s183
      %p192 = scmp.eq.s32.totalorder %s23, 1
      %p193 = por %p191, %p192
      %p194 = scmp.ne.s32.totalorder %s183, %s184
      %p195 = scmp.eq.s32.totalorder %s23, 0
      %p196 = por %p194, %p195
      %p197 = scmp.ne.s32.totalorder %s183, %s184
      %p198 = scmp.eq.s32.totalorder %s24, 1
      %p199 = por %p197, %p198
      %p201 = scmp.ne.s32.totalorder %s184, %s200
      %p202 = scmp.eq.s32.totalorder %s24, 0
      %p203 = por %p201, %p202
      %p204 = scmp.le.s32.totalorder 1, %s18
      %p205 = scmp.lt.s32.totalorder %s18, 3
      %p206 = pnand %p204, %p205
      %p207 = pneg %p206
      // Predicated region
      $region9: #{tpu_custom_call.1} parent=5 // pred_check
        _
      $region10: #{tpu_custom_call.1} parent=5 // pred_check_branch
        %209 = sbr.rel (%p206) target = $region12
      $region11: #{tpu_custom_call.1} parent=5 // pred_region
        %s210 = ssub.s32 %s18, 1
        // Predicated region
        $region13: #{tpu_custom_call.1} parent=11 // pred_check
          %p211 = pneg %p65
        $region14: #{tpu_custom_call.1} parent=11 // pred_check_branch
          %213 = sbr.rel (%p211) target = $region16
        $region15: #{tpu_custom_call.1} parent=11 // pred_region
          _
        $region16: #{tpu_custom_call.1} parent=11 // pred_fallthru
          _
        // Predicated region
        $region17: #{tpu_custom_call.1} parent=11 // pred_check
          %p214 = pneg %p86
        $region18: #{tpu_custom_call.1} parent=11 // pred_check_branch
          %216 = sbr.rel (%p214) target = $region20
        $region19: #{tpu_custom_call.1} parent=11 // pred_region
          _
        $region20: #{tpu_custom_call.1} parent=11 // pred_fallthru
          _
        // Predicated region
        $region21: #{tpu_custom_call.1} parent=11 // pred_check
          %p217 = pneg %p107
        $region22: #{tpu_custom_call.1} parent=11 // pred_check_branch
          %219 = sbr.rel (%p217) target = $region24
        $region23: #{tpu_custom_call.1} parent=11 // pred_region
          _
        $region24: #{tpu_custom_call.1} parent=11 // pred_fallthru
          _
        // Predicated region
        $region25: #{tpu_custom_call.1} parent=11 // pred_check
          %p220 = pneg %p128
        $region26: #{tpu_custom_call.1} parent=11 // pred_check_branch
          %222 = sbr.rel (%p220) target = $region28
        $region27: #{tpu_custom_call.1} parent=11 // pred_region
          _
        $region28: #{tpu_custom_call.1} parent=11 // pred_fallthru
          _
        // Predicated region
        $region29: #{tpu_custom_call.1} parent=11 // pred_check
          %p223 = pneg %p149
        $region30: #{tpu_custom_call.1} parent=11 // pred_check_branch
          %225 = sbr.rel (%p223) target = $region32
        $region31: #{tpu_custom_call.1} parent=11 // pred_region
          _
        $region32: #{tpu_custom_call.1} parent=11 // pred_fallthru
          _
        // Predicated region
        $region33: #{tpu_custom_call.1} parent=11 // pred_check
          %p226 = pneg %p170
        $region34: #{tpu_custom_call.1} parent=11 // pred_check_branch
          %228 = sbr.rel (%p226) target = $region36
        $region35: #{tpu_custom_call.1} parent=11 // pred_region
          _
        $region36: #{tpu_custom_call.1} parent=11 // pred_fallthru
          _
      $region12: #{tpu_custom_call.1} parent=5 // pred_fallthru
        _
      %p229 = scmp.lt.s32.totalorder %s18, 2
      // Predicated region
      $region37: #{tpu_custom_call.1} parent=5 // pred_check
        %p230 = pneg %p229
      $region38: #{tpu_custom_call.1} parent=5 // pred_check_branch
        %232 = sbr.rel (%p230) target = $region40
      $region39: #{tpu_custom_call.1} parent=5 // pred_region
        // Predicated region
        $region41: #{tpu_custom_call.1} parent=39 // pred_check
          %p233 = pneg %p38
        $region42: #{tpu_custom_call.1} parent=39 // pred_check_branch
          %235 = sbr.rel (%p233) target = $region44
        $region43: #{tpu_custom_call.1} parent=39 // pred_region
          %p236 = scmp.lt.s32.totalorder %s18, 1
          %s237 = scalar_select %p236, %s18, 1
          %s238 = smul.addr %s237, 2
          %s239 = smul.addr %s238, 4
          %s240 = scalar_lea.vmem %s0, %s239
        $region44: #{tpu_custom_call.1} parent=39 // pred_fallthru
          _
      $region40: #{tpu_custom_call.1} parent=5 // pred_fallthru
        _
      %p241 = scmp.le.s32.totalorder 1, %s18
      %p242 = scmp.lt.s32.totalorder %s18, 3
      %p243 = pnand %p241, %p242
      %p244 = pneg %p243
      // Predicated region
      $region45: #{tpu_custom_call.1} parent=5 // pred_check
        _
      $region46: #{tpu_custom_call.1} parent=5 // pred_check_branch
        %246 = sbr.rel (%p243) target = $region48
      $region47: #{tpu_custom_call.1} parent=5 // pred_region
        %s247 = ssub.s32 %s18, 1
        %p248 = scmp.lt.s32.totalorder %s23, 1
        %s249 = scalar_select %p248, %s23, 1
        %s250 = smul.addr %s249, 2
        %s251 = smul.addr %s250, 4
        %s252 = scalar_lea.vmem %s0, %s251
        %p253 = pneg %p44
        %p254 = pneg %p41
        %p255 = pneg %p65
        %p256 = pneg %p62
        %p257 = pneg %p86
        %p258 = pneg %p83
        %p259 = pneg %p107
        %p260 = pneg %p104
        %p261 = pneg %p128
        %p262 = pneg %p125
        %p263 = pneg %p149
        %p264 = pneg %p146
        %p265 = pneg %p170
        %p266 = pneg %p167
        %p267 = pneg %p196
        %p268 = pneg %p193
        %s269 = sand.u32 %s183, 1
        %s270 = scalar_lea.sflag [#allocation4], %s269
        %s271 = sand.u32 %s183, 1
        %s272 = smul.addr %s271, 8
        %s273 = scalar_lea.vmem [#allocation3], %s272
        %p274 = scmp.lt.s32.totalorder %s23, 1
        %s275 = scalar_select %p274, %s23, 1
        %s276 = smul.addr %s275, 2
        %s277 = smul.addr %s276, 4
        %s278 = scalar_lea.vmem %s0, %s277
        %v279 = vld [vmem:[%s278] sm:$0xff]
        %v280 = vld [vmem:[%s1] sm:$0xff]
        %v281 = vld [vmem:[%s1 + $0x8] sm:$0xff]
        %v283 = vcombine.high %v279, %v279
        %vm284 = vcmask 31744
        %v286 = vsel %vm284, %v280, 0
        %v289 = vsel %vm284, %v281, 0
        %vm291 = vcmask 1043456
        %v292 = vsel %vm291, %v279, 0
        %v294 = vsel %vm291, %v283, 0
        %296 = vmatprep.subr.mxu0 %v294
        %297 = vmatpush1.msra.mxu0 %v292
        %298 = vmatprep.subr.mxu0 0.0
        %299 = vmatpush1.msra.mxu0 0.0
        %300 = vmatprep.subr.mxu0 0.0
        %301 = vmatpush1.msra.mxu0 0.0
        %302 = vmatprep.subr.mxu0 0.0
        %303 = vmatpush1.msra.mxu0 0.0
        %304 = vmatprep.subr.mxu0 0.0
        %305 = vmatpush1.msra.mxu0 0.0
        %306 = vmatprep.subr.mxu0 0.0
        %307 = vmatpush1.msra.mxu0 0.0
        %308 = vmatprep.subr.mxu0 0.0
        %309 = vmatpush1.msra.mxu0 0.0
        %310 = vmatprep.subr.mxu0 0.0
        %311 = vmatpush1.msra.mxu0 0.0
        %312 = vmatprep.subr.mxu0 0.0
        %313 = vmatpush1.msra.mxu0 0.0
        %314 = vmatprep.subr.mxu0 0.0
        %315 = vmatpush1.msra.mxu0 0.0
        %316 = vmatprep.subr.mxu0 0.0
        %317 = vmatpush1.msra.mxu0 0.0
        %318 = vmatprep.subr.mxu0 0.0
        %319 = vmatpush1.msra.mxu0 0.0
        %320 = vmatprep.subr.mxu0 0.0
        %321 = vmatpush1.msra.mxu0 0.0
        %322 = vmatprep.subr.mxu0 0.0
        %323 = vmatpush1.msra.mxu0 0.0
        %324 = vmatprep.subr.mxu0 0.0
        %325 = vmatpush1.msra.mxu0 0.0
        %326 = vmatprep.subr.mxu0 0.0
        %327 = vmatpush1.msra.mxu0 0.0
        %328 = vmatprep.subr.mxu0 0.0
        %329 = vmatpush1.msra.mxu0 0.0
        %330 = vmatprep.subr.mxu0 0.0
        %331 = vmatpush1.msra.mxu0 0.0
        %332 = vmatprep.subr.mxu0 0.0
        %333 = vmatpush1.msra.mxu0 0.0
        %334 = vmatprep.subr.mxu0 0.0
        %335 = vmatpush1.msra.mxu0 0.0
        %336 = vmatprep.subr.mxu0 0.0
        %337 = vmatpush1.msra.mxu0 0.0
        %338 = vmatprep.subr.mxu0 0.0
        %339 = vmatpush1.msra.mxu0 0.0
        %340 = vmatprep.subr.mxu0 0.0
        %341 = vmatpush1.msra.mxu0 0.0
        %342 = vmatprep.subr.mxu0 0.0
        %343 = vmatpush1.msra.mxu0 0.0
        %344 = vmatprep.subr.mxu0 0.0
        %345 = vmatpush1.msra.mxu0 0.0
        %346 = vmatprep.subr.mxu0 0.0
        %347 = vmatpush1.msra.mxu0 0.0
        %348 = vmatprep.subr.mxu0 0.0
        %349 = vmatpush1.msra.mxu0 0.0
        %350 = vmatprep.subr.mxu0 0.0
        %351 = vmatpush1.msra.mxu0 0.0
        %352 = vmatprep.subr.mxu0 0.0
        %353 = vmatpush1.msra.mxu0 0.0
        %354 = vmatprep.subr.mxu0 0.0
        %355 = vmatpush1.msra.mxu0 0.0
        %356 = vmatprep.subr.mxu0 0.0
        %357 = vmatpush1.msra.mxu0 0.0
        %358 = vmatprep.subr.mxu0 0.0
        %359 = vmatpush1.msra.mxu0 0.0
        %360 = vmatprep.mubr.f32.mxu0 0.0
        %361 = vmatmul.mubr.f32.gmra.mrb[0].mxu0 %v286
        %v362 = vpop.f32.mrb[0].mxu0
        %v363 = vadd.f32 0.0, %v362
        %v364 = vpop.f32.mrb[0].mxu0
        %v365 = vadd.f32 0.0, %v364
        %366 = vmatprep.mubr.f32.mxu0 0.0
        %367 = vmatmul.mubr.f32.gmra.mrb[0].mxu0 %v289
        %v368 = vpop.f32.mrb[0].mxu0
        %v369 = vadd.f32 0.0, %v368
        %v370 = vpop.f32.mrb[0].mxu0
        %v371 = vadd.f32 0.0, %v370
        %372 = vdwg.mxu0
        %vm373 = vcmask 1040384
        %v374 = vsel %vm373, %v369, -inf
        %v375 = vsel %vm373, %v371, -inf
        %v376 = vmax.f32 %v374, %v375
        %377 = vmax.xlane.f32.xlu0 %v376
        %v378 = vpop.xlane.xlu0 %377
        %v379 = vsub.f32 %v369, %v378
        %v380 = vsub.f32 %v371, %v378
        %v381 = vmul.f32 %v379, 1.442695
        %v382 = vpow.pop %v381
        %v383 = vmul.f32 %v380, 1.442695
        %v384 = vpow.pop %v383
        %v385 = vsel %vm373, %v382, 0.0
        %v386 = vsel %vm373, %v384, 0.0
        %v387 = vadd.f32 %v385, %v386
        %388 = vadd.xlane.f32.xlu0 %v387
        %v389 = vpop.xlane.xlu0 %388
        %v390 = vlaneseq
        %v391 = vshrl.u32 %v390, 7
        %v392 = vsub.s32 0, %v391
        %v393 = vrot.slane %v382, %v392
        %v394 = vlaneseq
        %v395 = vshrl.u32 %v394, 7
        %v396 = vsub.s32 0, %v395
        %v397 = vrot.slane %v384, %v396
        %v398 = vmul.f32 %v363, %v393
        %v399 = vmul.f32 %v365, %v397
        %v400 = vadd.f32 %v398, %v399
        %401 = vadd.xlane.f32.xlu0 %v400
        %v402 = vpop.xlane.xlu0 %401
        %v403 = vlaneseq
        %v404 = vshrl.u32 %v403, 7
        %v405 = vsub.s32 0, %v404
        %v406 = vrot.slane %v389, %v405
        %v407 = vrcp.pop %v406
        %v408 = vmul.f32 %v402, %v407
        %v409 = vld [vmem:[%s3] sm:$0xff]
        %v410 = vadd.f32 %v408, %v409
        %v411 = vld [vmem:[%s2] sm:$0xf]
        %v412 = vld [vmem:[%s4] sm:$0xf]
        %vm413 = vcmask 64512
        %v415 = vsel %vm413, %v411, 0
        %417 = vmatprep.subr.mxu0 0.0
        %418 = vmatpush1.msra.mxu0 %v410
        %419 = vmatprep.subr.mxu0 0.0
        %420 = vmatpush1.msra.mxu0 0.0
        %421 = vmatprep.subr.mxu0 0.0
        %422 = vmatpush1.msra.mxu0 0.0
        %423 = vmatprep.subr.mxu0 0.0
        %424 = vmatpush1.msra.mxu0 0.0
        %425 = vmatprep.subr.mxu0 0.0
        %426 = vmatpush1.msra.mxu0 0.0
        %427 = vmatprep.subr.mxu0 0.0
        %428 = vmatpush1.msra.mxu0 0.0
        %429 = vmatprep.subr.mxu0 0.0
        %430 = vmatpush1.msra.mxu0 0.0
        %431 = vmatprep.subr.mxu0 0.0
        %432 = vmatpush1.msra.mxu0 0.0
        %433 = vmatprep.subr.mxu0 0.0
        %434 = vmatpush1.msra.mxu0 0.0
        %435 = vmatprep.subr.mxu0 0.0
        %436 = vmatpush1.msra.mxu0 0.0
        %437 = vmatprep.subr.mxu0 0.0
        %438 = vmatpush1.msra.mxu0 0.0
        %439 = vmatprep.subr.mxu0 0.0
        %440 = vmatpush1.msra.mxu0 0.0
        %441 = vmatprep.subr.mxu0 0.0
        %442 = vmatpush1.msra.mxu0 0.0
        %443 = vmatprep.subr.mxu0 0.0
        %444 = vmatpush1.msra.mxu0 0.0
        %445 = vmatprep.subr.mxu0 0.0
        %446 = vmatpush1.msra.mxu0 0.0
        %447 = vmatprep.subr.mxu0 0.0
        %448 = vmatpush1.msra.mxu0 0.0
        %449 = vmatprep.subr.mxu0 0.0
        %450 = vmatpush1.msra.mxu0 0.0
        %451 = vmatprep.subr.mxu0 0.0
        %452 = vmatpush1.msra.mxu0 0.0
        %453 = vmatprep.subr.mxu0 0.0
        %454 = vmatpush1.msra.mxu0 0.0
        %455 = vmatprep.subr.mxu0 0.0
        %456 = vmatpush1.msra.mxu0 0.0
        %457 = vmatprep.subr.mxu0 0.0
        %458 = vmatpush1.msra.mxu0 0.0
        %459 = vmatprep.subr.mxu0 0.0
        %460 = vmatpush1.msra.mxu0 0.0
        %461 = vmatprep.subr.mxu0 0.0
        %462 = vmatpush1.msra.mxu0 0.0
        %463 = vmatprep.subr.mxu0 0.0
        %464 = vmatpush1.msra.mxu0 0.0
        %465 = vmatprep.subr.mxu0 0.0
        %466 = vmatpush1.msra.mxu0 0.0
        %467 = vmatprep.subr.mxu0 0.0
        %468 = vmatpush1.msra.mxu0 0.0
        %469 = vmatprep.subr.mxu0 0.0
        %470 = vmatpush1.msra.mxu0 0.0
        %471 = vmatprep.subr.mxu0 0.0
        %472 = vmatpush1.msra.mxu0 0.0
        %473 = vmatprep.subr.mxu0 0.0
        %474 = vmatpush1.msra.mxu0 0.0
        %475 = vmatprep.subr.mxu0 0.0
        %476 = vmatpush1.msra.mxu0 0.0
        %477 = vmatprep.subr.mxu0 0.0
        %478 = vmatpush1.msra.mxu0 0.0
        %479 = vmatprep.subr.mxu0 0.0
        %480 = vmatpush1.msra.mxu0 0.0
        %481 = vmatprep.mubr.f32.mxu0 0.0
        %482 = vmatmul.mubr.f32.gmra.mrb[0].mxu0 %v415
        %v483 = vpop.f32.mrb[0].mxu0
        %v484 = vadd.f32 %v412, %v483
        %v485 = vpop.f32.mrb[0].mxu0
        %486 = vdwg.mxu0
        %v487 = vld [vmem:[%s5] sm:$0x1]
        %v488 = vld [vmem:[#allocation2] sm:$0x1]
        %490 = vset.pattern.permute.xlu0 0
        %491 = vperm.xlu0 %490, %v488
        %v492 = vpop.permute.xlu0 %491
        %v494 = vlaneseq
        %v495 = vshrl.u32 %v494, 7
        %v496 = vsub.s32 0, %v495
        %v497 = vrot.slane %v492, %v496
        %v499 = vsel %vm284, %v487, 0
        %501 = vmatprep.subr.mxu0 %v294
        %502 = vmatpush1.msra.mxu0 %v292
        %503 = vmatprep.subr.mxu0 0.0
        %504 = vmatpush1.msra.mxu0 0.0
        %505 = vmatprep.subr.mxu0 0.0
        %506 = vmatpush1.msra.mxu0 0.0
        %507 = vmatprep.subr.mxu0 0.0
        %508 = vmatpush1.msra.mxu0 0.0
        %509 = vmatprep.subr.mxu0 0.0
        %510 = vmatpush1.msra.mxu0 0.0
        %511 = vmatprep.subr.mxu0 0.0
        %512 = vmatpush1.msra.mxu0 0.0
        %513 = vmatprep.subr.mxu0 0.0
        %514 = vmatpush1.msra.mxu0 0.0
        %515 = vmatprep.subr.mxu0 0.0
        %516 = vmatpush1.msra.mxu0 0.0
        %517 = vmatprep.subr.mxu0 0.0
        %518 = vmatpush1.msra.mxu0 0.0
        %519 = vmatprep.subr.mxu0 0.0
        %520 = vmatpush1.msra.mxu0 0.0
        %521 = vmatprep.subr.mxu0 0.0
        %522 = vmatpush1.msra.mxu0 0.0
        %523 = vmatprep.subr.mxu0 0.0
        %524 = vmatpush1.msra.mxu0 0.0
        %525 = vmatprep.subr.mxu0 0.0
        %526 = vmatpush1.msra.mxu0 0.0
        %527 = vmatprep.subr.mxu0 0.0
        %528 = vmatpush1.msra.mxu0 0.0
        %529 = vmatprep.subr.mxu0 0.0
        %530 = vmatpush1.msra.mxu0 0.0
        %531 = vmatprep.subr.mxu0 0.0
        %532 = vmatpush1.msra.mxu0 0.0
        %533 = vmatprep.subr.mxu0 0.0
        %534 = vmatpush1.msra.mxu0 0.0
        %535 = vmatprep.subr.mxu0 0.0
        %536 = vmatpush1.msra.mxu0 0.0
        %537 = vmatprep.subr.mxu0 0.0
        %538 = vmatpush1.msra.mxu0 0.0
        %539 = vmatprep.subr.mxu0 0.0
        %540 = vmatpush1.msra.mxu0 0.0
        %541 = vmatprep.subr.mxu0 0.0
        %542 = vmatpush1.msra.mxu0 0.0
        %543 = vmatprep.subr.mxu0 0.0
        %544 = vmatpush1.msra.mxu0 0.0
        %545 = vmatprep.subr.mxu0 0.0
        %546 = vmatpush1.msra.mxu0 0.0
        %547 = vmatprep.subr.mxu0 0.0
        %548 = vmatpush1.msra.mxu0 0.0
        %549 = vmatprep.subr.mxu0 0.0
        %550 = vmatpush1.msra.mxu0 0.0
        %551 = vmatprep.subr.mxu0 0.0
        %552 = vmatpush1.msra.mxu0 0.0
        %553 = vmatprep.subr.mxu0 0.0
        %554 = vmatpush1.msra.mxu0 0.0
        %555 = vmatprep.subr.mxu0 0.0
        %556 = vmatpush1.msra.mxu0 0.0
        %557 = vmatprep.subr.mxu0 0.0
        %558 = vmatpush1.msra.mxu0 0.0
        %559 = vmatprep.subr.mxu0 0.0
        %560 = vmatpush1.msra.mxu0 0.0
        %561 = vmatprep.subr.mxu0 0.0
        %562 = vmatpush1.msra.mxu0 0.0
        %563 = vmatprep.subr.mxu0 0.0
        %564 = vmatpush1.msra.mxu0 0.0
        %565 = vmatprep.mubr.f32.mxu0 0.0
        %566 = vmatmul.mubr.f32.gmra.mrb[0].mxu0 %v499
        %v567 = vpop.f32.mrb[0].mxu0
        %v568 = vadd.f32 %v497, %v567
        %v569 = vpop.f32.mrb[0].mxu0
        %v570 = vadd.f32 %v497, %v569
        %571 = vdwg.mxu0
        %v572 = vxor.u32 %v568, 2147483648
        %v573 = vxor.u32 %v570, 2147483648
        %v574 = vmul.f32 %v572, 1.442695
        %v575 = vpow.pop %v574
        %v576 = vmul.f32 %v573, 1.442695
        %v577 = vpow.pop %v576
        %v578 = vadd.f32 %v575, 1.0
        %v579 = vadd.f32 %v577, 1.0
        %v580 = vrcp.pop %v578
        %v581 = vmul.f32 1.0, %v580
        %v582 = vrcp.pop %v579
        %v583 = vmul.f32 1.0, %v582
        %585 = vset.pattern.permute.xlu0 0
        %586 = vperm.xlu0 %585, %v484
        %v587 = vpop.permute.xlu0 %586
        %v589 = vlaneseq
        %v590 = vshrl.u32 %v589, 7
        %v591 = vsub.s32 0, %v590
        %v592 = vrot.slane %v581, %v591
        %v593 = vlaneseq
        %v594 = vshrl.u32 %v593, 7
        %v595 = vsub.s32 0, %v594
        %v596 = vrot.slane %v583, %v595
        %v597 = vmul.f32 %v587, %v592
        %v598 = vmul.f32 %v587, %v596
        %v601 = vcombine.low %v597, %v598
        %v603 = vadd.f32 %v279, %v601
        %604 = vst [vmem:[%s273] sm:$0xff] %v603
        %s605 = sand.u32 %s183, 1
        %s606 = scalar_lea.sflag [#allocation4], %s605
        %s607 = sand.u32 %s183, 1
        %s608 = smul.addr %s607, 8
        %s609 = scalar_lea.vmem [#allocation3], %s608
        // Predicated region
        $region49: #{tpu_custom_call.1} parent=47 // pred_check
          %p610 = pneg %p193
        $region50: #{tpu_custom_call.1} parent=47 // pred_check_branch
          %612 = sbr.rel (%p610) target = $region52
        $region51: #{tpu_custom_call.1} parent=47 // pred_region
          %s614 = ssub.s32 128, 128
          %615 = vsyncadd %s606, %s614
          %s616 = smul.addr %s23, 2
          %s617 = smul.addr %s616, 64
          %s618 = scalar_lea.hbm %s7, %s617
          %s620 = sshll.u32 %s609, 4
          %s621 = int_to_ptr.vmem [resolvable:$true] %s620
          %623 = dma.vmem_to_hbm [thread:$0]  %s621, 128, %s618, %s606
        $region52: #{tpu_custom_call.1} parent=47 // pred_fallthru
          _
      $region48: #{tpu_custom_call.1} parent=5 // pred_fallthru
        _
      %p624 = scmp.le.s32.totalorder 2, %s18
      // Predicated region
      $region53: #{tpu_custom_call.1} parent=5 // pred_check
        %p625 = pneg %p624
      $region54: #{tpu_custom_call.1} parent=5 // pred_check_branch
        %627 = sbr.rel (%p625) target = $region56
      $region55: #{tpu_custom_call.1} parent=5 // pred_region
        %s628 = ssub.s32 %s18, 2
        // Predicated region
        $region57: #{tpu_custom_call.1} parent=55 // pred_check
          %p629 = pneg %p199
        $region58: #{tpu_custom_call.1} parent=55 // pred_check_branch
          %631 = sbr.rel (%p629) target = $region60
        $region59: #{tpu_custom_call.1} parent=55 // pred_region
          %s632 = sand.u32 %s184, 1
          %s633 = scalar_lea.sflag [#allocation4], %s632
          %s634 = sand.u32 %s184, 1
          %s635 = smul.addr %s634, 8
          %s636 = scalar_lea.vmem [#allocation3], %s635
          %637 = dma.done %s633, 128
        $region60: #{tpu_custom_call.1} parent=55 // pred_fallthru
          _
      $region56: #{tpu_custom_call.1} parent=5 // pred_fallthru
        _
    $region6: #{tpu_custom_call.1} parent=1 // loop_footer
      %s22 = sadd.s32 1, %s18
    $region7: #{tpu_custom_call.1} parent=1 // loop_footer_branch
      %17 = sbr.rel target = $region3
    $region8: #{tpu_custom_call.1} parent=1 // loop_exit
      _
    %638 = vsyncpa [#allocation4], 1
    %s639 = scalar_lea.sflag [#allocation4], 1
    %640 = vsyncpa %s639, 1

</llo_original>
